<compile_context>
chip_gen: v7x
topology: tpu7x:2x2x1
jax: 0.10.0
libtpu: 0.0.40
codegen_flags: <defaults>
</compile_context>

<pallas_src>
import jax
import jax.numpy as jnp
from jax.experimental import pallas as pl
from jax.experimental.pallas import tpu as pltpu

SUB = 8  # sublane granularity


def _round_up(n, m):
    return ((n + m - 1) // m) * m


def linear_clamp_kernel(x_ref, wt_ref, b_ref, o_ref):
    # x_ref: (TB, IN), wt_ref: (IN, OUT) == W^T, b_ref: (1, OUT), o_ref: (TB, OUT)
    y = jnp.dot(x_ref[...], wt_ref[...], preferred_element_type=jnp.float32)
    y = y + b_ref[...]
    y = jnp.maximum(y, 0.5)    # torch.clamp_min(v1, 0.5)
    y = jnp.minimum(y, -0.1)   # torch.clamp_max(v2, -0.1)
    o_ref[...] = y.astype(o_ref.dtype)


def preprocess_params(weight, bias):
    """One-time parameter prep (hoisted out of the forward path).

    weight: (OUT, IN) as in nn.Linear; bias: (OUT,).
    Returns W^T (IN, OUT) and bias (1, OUT), unpadded (Mosaic pads in VMEM).
    """
    wt = jnp.asarray(weight, jnp.float32).T          # (IN, OUT)
    b2 = jnp.asarray(bias, jnp.float32).reshape(1, -1)  # (1, OUT)
    return wt, b2


def _cost(B, IN, OUT):
    return pl.CostEstimate(
        flops=2 * B * IN * OUT,
        transcendentals=0,
        bytes_accessed=4 * (B * IN + IN * OUT + OUT + B * OUT),
    )


def model_forward(x, wt, b2):
    """x: (B, IN) f32; wt: (IN, OUT) f32; b2: (1, OUT) f32 -> (B, OUT) f32."""
    x = jnp.asarray(x, jnp.float32)
    B, IN = x.shape
    OUT = wt.shape[1]

    if B <= 1024:
        # Dispatch-minimal path: single block, no grid, no padding, no slicing.
        return pl.pallas_call(
            linear_clamp_kernel,
            out_shape=jax.ShapeDtypeStruct((B, OUT), jnp.float32),
            in_specs=[
                pl.BlockSpec((B, IN), lambda: (0, 0)),
                pl.BlockSpec((IN, OUT), lambda: (0, 0)),
                pl.BlockSpec((1, OUT), lambda: (0, 0)),
            ],
            out_specs=pl.BlockSpec((B, OUT), lambda: (0, 0)),
            cost_estimate=_cost(B, IN, OUT),
        )(x, wt, b2)

    # Large-batch path: tile the batch axis (mem-bound; tb=512 sits near the HBM
    # roofline and guarantees >=2 blocks so v7x megacore sharding engages).
    tb = 512
    b_pad = _round_up(max(B, SUB), tb)
    x_p = x if b_pad == B else jnp.pad(x, ((0, b_pad - B), (0, 0)))

    out = pl.pallas_call(
        linear_clamp_kernel,
        out_shape=jax.ShapeDtypeStruct((b_pad, OUT), jnp.float32),
        grid=(b_pad // tb,),
        in_specs=[
            pl.BlockSpec((tb, IN), lambda i: (i, 0)),     # activation tile (pipelined)
            pl.BlockSpec((IN, OUT), lambda i: (0, 0)),    # W^T resident in VMEM
            pl.BlockSpec((1, OUT), lambda i: (0, 0)),     # bias resident in VMEM
        ],
        out_specs=pl.BlockSpec((tb, OUT), lambda i: (i, 0)),  # narrow output, no slice-copy of cols
        compiler_params=pltpu.CompilerParams(
            dimension_semantics=("parallel",),   # shards over 2 TCs on v7x; no-op on v5e/v6e
        ),
        cost_estimate=_cost(b_pad, IN, OUT),
    )(x_p, wt, b2)

    return out if b_pad == B else out[:B]


if __name__ == "__main__":
    key = jax.random.PRNGKey(0)
    kx, kw, kb = jax.random.split(key, 3)

    B, IN, OUT = 8, 10, 10
    # Deterministic "parameter init" mimicking nn.Linear default (uniform in ±1/sqrt(in))
    bound = 1.0 / (IN ** 0.5)
    weight = jax.random.uniform(kw, (OUT, IN), jnp.float32, -bound, bound)
    bias = jax.random.uniform(kb, (OUT,), jnp.float32, -bound, bound)
    x = jax.random.normal(kx, (B, IN), jnp.float32)

    # One-time parameter preprocessing (not on the per-forward path).
    wt, b2 = preprocess_params(weight, bias)

    out = model_forward(x, wt, b2)
    out = jax.block_until_ready(out)

    # Reference check in plain JAX
    ref = jnp.minimum(jnp.maximum(x @ weight.T + bias, 0.5), -0.1)
    assert out.shape == (B, OUT)
    assert jnp.allclose(out, ref, atol=1e-5), "mismatch vs reference"
    print("KERNEL_OK")
</pallas_src>

<mosaic_0001>
module attributes {stable_mosaic.version = 11 : i64} {
  func.func @linear_clamp_kernel(%arg0: memref<8x10xf32, #tpu.memory_space<vmem>>, %arg1: memref<10x10xf32, #tpu.memory_space<vmem>>, %arg2: memref<1x10xf32, #tpu.memory_space<vmem>>, %arg3: memref<8x10xf32, #tpu.memory_space<vmem>>) attributes {dimension_semantics = [], scalar_prefetch = 0 : i64, scratch_operands = 0 : i64, tpu.core_type = #tpu.core_type<tc>} {
    %c0 = arith.constant 0 : index
    %c0_0 = arith.constant 0 : index
    %0 = vector.load %arg0[%c0, %c0_0] : memref<8x10xf32, #tpu.memory_space<vmem>>, vector<8x10xf32>
    %c0_1 = arith.constant 0 : index
    %c0_2 = arith.constant 0 : index
    %1 = vector.load %arg1[%c0_1, %c0_2] : memref<10x10xf32, #tpu.memory_space<vmem>>, vector<10x10xf32>
    %cst = arith.constant dense<0.000000e+00> : vector<8x10xf32>
    %2 = tpu.matmul %0, %1, %cst {dimension_numbers = #tpu.dot_dimension_numbers<[1], [0], [0], [1], [0, 0, 1, 1], [], []>} : vector<8x10xf32>, vector<10x10xf32>, vector<8x10xf32> -> vector<8x10xf32>
    %c0_3 = arith.constant 0 : index
    %c0_4 = arith.constant 0 : index
    %3 = vector.load %arg2[%c0_3, %c0_4] : memref<1x10xf32, #tpu.memory_space<vmem>>, vector<1x10xf32>
    %4 = vector.broadcast %3 : vector<1x10xf32> to vector<8x10xf32>
    %5 = arith.addf %2, %4 : vector<8x10xf32>
    %cst_5 = arith.constant 5.000000e-01 : f32
    %6 = vector.broadcast %cst_5 : f32 to vector<8x10xf32>
    %7 = arith.maximumf %5, %6 : vector<8x10xf32>
    %cst_6 = arith.constant -1.000000e-01 : f32
    %8 = vector.broadcast %cst_6 : f32 to vector<8x10xf32>
    %9 = arith.minimumf %7, %8 : vector<8x10xf32>
    %c0_7 = arith.constant 0 : index
    %c0_8 = arith.constant 0 : index
    %10 = vector.load %arg3[%c0_7, %c0_8] : memref<8x10xf32, #tpu.memory_space<vmem>>, vector<8x10xf32>
    tpu.vector_store %arg3[%c0_7, %c0_8], %9 {strides = array<i32>} : memref<8x10xf32, #tpu.memory_space<vmem>>, vector<8x10xf32>,
    return
  }
}

</mosaic_0001>

<llo_original>
// kernel: tpu_custom_call.1
$region0: #{tpu_custom_call.1}
  #allocation0 [shape = 'u32[]', space=smem, size = 0x4, offset = 0x4, fixed_abs, tag = 'smem constant byte address 0x4 - core index']
  #allocation1 [shape = 'u32[144,128]{1,0:T(1,128)}', space=vmem, size = 0x12000, scoped, tag = 'internal scratch']
  %s0 = inlined_call_operand.hbm [shape: f32[8,10], index: 0, kind: input, shape index: {}]
  %s1 = inlined_call_operand.hbm [shape: f32[10,10], index: 1, kind: input, shape index: {}]
  %s2 = inlined_call_operand.vmem [shape: f32[1,10], index: 2, kind: input, shape index: {}]
  %s3 = inlined_call_operand.hbm [shape: f32[8,10], index: 3, kind: output, shape index: {}]
  %s4 = sld [smem:[#allocation0]]
  $region30: #{tpu_custom_call.1} parent=0
    _
  %s6 = ssub.s32 1, %s4
  %s7 = scalar_select 0, %s6, %s4
  $region1: #{tpu_custom_call.1} parent=0
    #allocation2 [shape = 'u8[4096]{0}', space=vmem, size = 0x1000, scoped, tag = 'input window, operand 0, single buffered']
    #allocation3 [shape = 's32[1]{0}', space=sflag, size = 0x4, scoped, tag = 'scoped memory for tpu_custom_call.1']
    #allocation4 [shape = 's32[1]{0}', space=sflag, size = 0x4, scoped, tag = 'scoped memory for tpu_custom_call.1']
    #allocation5 [shape = 'u8[8192]{0}', space=vmem, size = 0x2000, scoped, tag = 'input window, operand 1, single buffered']
    #allocation6 [shape = 's32[1]{0}', space=sflag, size = 0x4, scoped, tag = 'scoped memory for tpu_custom_call.1']
    #allocation7 [shape = 'u8[4096]{0}', space=vmem, size = 0x1000, scoped, tag = 'output window, operand 0, single buffered']
    %8 = vsyncpa [#allocation3], 0
    %9 = vsyncpa [#allocation6], 0
    %10 = vsyncpa [#allocation4], 0
    // Predicated region
    $region2: #{tpu_custom_call.1} parent=1 // pred_check
      _
    $region3: #{tpu_custom_call.1} parent=1 // pred_check_branch
      %12 = sbr.rel (0) target = $region5
    $region4: #{tpu_custom_call.1} parent=1 // pred_region
      %s14 = ssub.s32 128, 128
      %15 = vsyncadd [#allocation3], %s14
      %s17 = sshll.u32 [#allocation2], 4
      %s18 = int_to_ptr.vmem [resolvable:$true] %s17
      %20 = dma.hbm_to_vmem [thread:$0]  %s0, 128, %s18, [#allocation3]
    $region5: #{tpu_custom_call.1} parent=1 // pred_fallthru
      _
    // Predicated region
    $region6: #{tpu_custom_call.1} parent=1 // pred_check
      _
    $region7: #{tpu_custom_call.1} parent=1 // pred_check_branch
      %22 = sbr.rel (0) target = $region9
    $region8: #{tpu_custom_call.1} parent=1 // pred_region
      %s24 = ssub.s32 256, 256
      %25 = vsyncadd [#allocation6], %s24
      %s26 = sshll.u32 [#allocation5], 4
      %s27 = int_to_ptr.vmem [resolvable:$true] %s26
      %32 = dma.hbm_to_vmem [thread:$0]  %s1, 256, %s27, [#allocation6], 128, 128, 8
    $region9: #{tpu_custom_call.1} parent=1 // pred_fallthru
      _
    // Predicated region
    $region10: #{tpu_custom_call.1} parent=1 // pred_check
      _
    $region11: #{tpu_custom_call.1} parent=1 // pred_check_branch
      %34 = sbr.rel (0) target = $region13
    $region12: #{tpu_custom_call.1} parent=1 // pred_region
      _
    $region13: #{tpu_custom_call.1} parent=1 // pred_fallthru
      _
    // Predicated region
    $region14: #{tpu_custom_call.1} parent=1 // pred_check
      _
    $region15: #{tpu_custom_call.1} parent=1 // pred_check_branch
      %36 = sbr.rel (0) target = $region17
    $region16: #{tpu_custom_call.1} parent=1 // pred_region
      %37 = dma.done [#allocation3], 128
    $region17: #{tpu_custom_call.1} parent=1 // pred_fallthru
      _
    // Predicated region
    $region18: #{tpu_custom_call.1} parent=1 // pred_check
      _
    $region19: #{tpu_custom_call.1} parent=1 // pred_check_branch
      %39 = sbr.rel (0) target = $region21
    $region20: #{tpu_custom_call.1} parent=1 // pred_region
      %40 = dma.done [#allocation6], 256
    $region21: #{tpu_custom_call.1} parent=1 // pred_fallthru
      _
    %v41 = vld [vmem:[#allocation2] sm:$0xff]
    %v42 = vld [vmem:[#allocation5] sm:$0xff]
    %v43 = vld [vmem:[#allocation5 + $0x8] sm:$0x3]
    %v44 = vld [vmem:[%s2] sm:$0x1]
    %v46 = vlaneseq
    %v47 = vshrl.u32 %v46, 7
    %v48 = vsub.s32 0, %v47
    %v49 = vrot.slane %v44, %v48
    %vm51 = vcmask 80896
    %v53 = vsel %vm51, %v41, 0
    %vm55 = vcmask 1041408
    %v57 = vsel %vm55, %v43, 0
    %59 = vmatprep.subr.mxu0 0.0
    %60 = vmatpush1.msra.mxu0 %v42
    %61 = vmatprep.subr.mxu0 0.0
    %62 = vmatpush1.msra.mxu0 %v57
    %63 = vmatprep.subr.mxu0 0.0
    %64 = vmatpush1.msra.mxu0 0.0
    %65 = vmatprep.subr.mxu0 0.0
    %66 = vmatpush1.msra.mxu0 0.0
    %67 = vmatprep.subr.mxu0 0.0
    %68 = vmatpush1.msra.mxu0 0.0
    %69 = vmatprep.subr.mxu0 0.0
    %70 = vmatpush1.msra.mxu0 0.0
    %71 = vmatprep.subr.mxu0 0.0
    %72 = vmatpush1.msra.mxu0 0.0
    %73 = vmatprep.subr.mxu0 0.0
    %74 = vmatpush1.msra.mxu0 0.0
    %75 = vmatprep.subr.mxu0 0.0
    %76 = vmatpush1.msra.mxu0 0.0
    %77 = vmatprep.subr.mxu0 0.0
    %78 = vmatpush1.msra.mxu0 0.0
    %79 = vmatprep.subr.mxu0 0.0
    %80 = vmatpush1.msra.mxu0 0.0
    %81 = vmatprep.subr.mxu0 0.0
    %82 = vmatpush1.msra.mxu0 0.0
    %83 = vmatprep.subr.mxu0 0.0
    %84 = vmatpush1.msra.mxu0 0.0
    %85 = vmatprep.subr.mxu0 0.0
    %86 = vmatpush1.msra.mxu0 0.0
    %87 = vmatprep.subr.mxu0 0.0
    %88 = vmatpush1.msra.mxu0 0.0
    %89 = vmatprep.subr.mxu0 0.0
    %90 = vmatpush1.msra.mxu0 0.0
    %91 = vmatprep.subr.mxu0 0.0
    %92 = vmatpush1.msra.mxu0 0.0
    %93 = vmatprep.subr.mxu0 0.0
    %94 = vmatpush1.msra.mxu0 0.0
    %95 = vmatprep.subr.mxu0 0.0
    %96 = vmatpush1.msra.mxu0 0.0
    %97 = vmatprep.subr.mxu0 0.0
    %98 = vmatpush1.msra.mxu0 0.0
    %99 = vmatprep.subr.mxu0 0.0
    %100 = vmatpush1.msra.mxu0 0.0
    %101 = vmatprep.subr.mxu0 0.0
    %102 = vmatpush1.msra.mxu0 0.0
    %103 = vmatprep.subr.mxu0 0.0
    %104 = vmatpush1.msra.mxu0 0.0
    %105 = vmatprep.subr.mxu0 0.0
    %106 = vmatpush1.msra.mxu0 0.0
    %107 = vmatprep.subr.mxu0 0.0
    %108 = vmatpush1.msra.mxu0 0.0
    %109 = vmatprep.subr.mxu0 0.0
    %110 = vmatpush1.msra.mxu0 0.0
    %111 = vmatprep.subr.mxu0 0.0
    %112 = vmatpush1.msra.mxu0 0.0
    %113 = vmatprep.subr.mxu0 0.0
    %114 = vmatpush1.msra.mxu0 0.0
    %115 = vmatprep.subr.mxu0 0.0
    %116 = vmatpush1.msra.mxu0 0.0
    %117 = vmatprep.subr.mxu0 0.0
    %118 = vmatpush1.msra.mxu0 0.0
    %119 = vmatprep.subr.mxu0 0.0
    %120 = vmatpush1.msra.mxu0 0.0
    %121 = vmatprep.subr.mxu0 0.0
    %122 = vmatpush1.msra.mxu0 0.0
    %123 = vmatprep.mubr.f32.mxu0 0.0
    %124 = vmatmul.mubr.f32.gmra.mrb[0].mxu0 %v53
    %v125 = vpop.f32.mrb[0].mxu0
    %v126 = vadd.f32 %v49, %v125
    %v127 = vpop.f32.mrb[0].mxu0
    %128 = vdwg.mxu0
    %v129 = vmax.f32 %v126, 0.5
    %v130 = vmin.f32 %v129, -0.1
    %131 = vst.msk [vmem:[#allocation7] sm:$0xff] %vm51, %v130
    // Predicated region
    $region22: #{tpu_custom_call.1} parent=1 // pred_check
      _
    $region23: #{tpu_custom_call.1} parent=1 // pred_check_branch
      %133 = sbr.rel (0) target = $region25
    $region24: #{tpu_custom_call.1} parent=1 // pred_region
      %s135 = ssub.s32 128, 128
      %136 = vsyncadd [#allocation4], %s135
      %s138 = sshll.u32 [#allocation7], 4
      %s139 = int_to_ptr.vmem [resolvable:$true] %s138
      %141 = dma.vmem_to_hbm [thread:$0]  %s139, 128, %s3, [#allocation4]
    $region25: #{tpu_custom_call.1} parent=1 // pred_fallthru
      _
    // Predicated region
    $region26: #{tpu_custom_call.1} parent=1 // pred_check
      _
    $region27: #{tpu_custom_call.1} parent=1 // pred_check_branch
      %143 = sbr.rel (0) target = $region29
    $region28: #{tpu_custom_call.1} parent=1 // pred_region
      %144 = dma.done [#allocation4], 128
    $region29: #{tpu_custom_call.1} parent=1 // pred_fallthru
      _
    %145 = vsyncpa [#allocation3], 1
    %146 = vsyncpa [#allocation6], 1
    %147 = vsyncpa [#allocation4], 1

</llo_original>
